<compile_context>
chip_gen: v7x
topology: tpu7x:2x2x1
jax: 0.10.0
libtpu: 0.0.40
codegen_flags: <defaults>
</compile_context>

<pallas_src>
import math

import jax
import jax.numpy as jnp
from jax import lax
from jax.experimental import pallas as pl
from jax.experimental.pallas import tpu as pltpu


_TILE_BUDGET_BYTES = 8 * 1024 * 1024   # per input tile; Pallas double-buffers it
_VMEM_LIMIT_BYTES = 48 * 1024 * 1024   # headroom under v7x's 64 MiB physical VMEM
_MAX_TILE_ROWS = 1024


def _sublane_align(dtype_bytes):
    # second-to-last block dim alignment: 8 (f32), 16 (bf16/f16), 32 (int8/fp8)
    return {4: 8, 2: 16, 1: 32}.get(dtype_bytes, 8)


def _choose_tiles(rows, hw, dtype_bytes):
    align = _sublane_align(dtype_bytes)

    if hw * dtype_bytes * align <= _TILE_BUDGET_BYTES:
        # Whole rows fit in one tile: single reduction step over hw.
        tile_hw = hw
        tr = _TILE_BUDGET_BYTES // (hw * dtype_bytes)
        tr = min(tr, _MAX_TILE_ROWS, rows)
        if tr < rows:
            tr = max(align, (tr // align) * align)
        tile_rows = tr
    else:
        # Large spatial size: stream hw through a reduction grid axis.
        tile_rows = min(rows, 256)
        if tile_rows < rows:
            tile_rows = max(align, (tile_rows // align) * align)
        thw = _TILE_BUDGET_BYTES // (tile_rows * dtype_bytes)
        if thw >= hw:
            tile_hw = hw
        else:
            tile_hw = max(128, (thw // 128) * 128)

    # Keep >= 2 row tiles when possible so v7x's two TensorCores both get work.
    if tile_rows >= rows and rows > align:
        half = ((rows + 1) // 2 + align - 1) // align * align
        if half < rows:
            tile_rows = half

    return tile_rows, tile_hw


def _make_std_kernel(hw, tile_hw):
    need_mask = (hw % tile_hw) != 0
    inv_n = 1.0 / hw
    denom = float(hw - 1)  # ddof=1; hw==1 -> 0/0 -> NaN (matches torch)

    def kernel(x_ref, o_ref, s_ref, ss_ref):
        k = pl.program_id(1)

        @pl.when(k == 0)
        def _init():
            s_ref[...] = jnp.zeros_like(s_ref)
            ss_ref[...] = jnp.zeros_like(ss_ref)

        x = x_ref[...].astype(jnp.float32)
        if need_mask:
            # ragged last hw tile: zero out columns past the true extent
            col = k * tile_hw + lax.broadcasted_iota(jnp.int32, x.shape, 1)
            x = jnp.where(col < hw, x, 0.0)

        s_ref[...] += jnp.sum(x, axis=1, keepdims=True)
        ss_ref[...] += jnp.sum(x * x, axis=1, keepdims=True)

        @pl.when(k == pl.num_programs(1) - 1)
        def _finalize():
            s = s_ref[...]
            ss = ss_ref[...]
            var = (ss - s * s * jnp.float32(inv_n)) / jnp.float32(denom)
            var = jnp.maximum(var, 0.0)  # clamp tiny negatives from cancellation
            o_ref[...] = jnp.sqrt(var).astype(o_ref.dtype)

    return kernel


def std_pool(x):
    """StdPool forward: x (b, c, h, w) -> (b, c, 1, 1) unbiased std over spatial."""
    b, c, h, w = x.shape
    rows = b * c
    hw = h * w
    x2 = x.reshape(rows, hw)  # no padding copy of the input

    dtype_bytes = jnp.dtype(x.dtype).itemsize
    tile_rows, tile_hw = _choose_tiles(rows, hw, dtype_bytes)

    num_rt = math.ceil(rows / tile_rows)
    num_kt = math.ceil(hw / tile_hw)
    padded_rows = num_rt * tile_rows  # pads only the tiny output, not the input

    out = pl.pallas_call(
        _make_std_kernel(hw, tile_hw),
        out_shape=jax.ShapeDtypeStruct((padded_rows, 1), x.dtype),
        grid_spec=pltpu.PrefetchScalarGridSpec(
            num_scalar_prefetch=0,
            grid=(num_rt, num_kt),
            in_specs=[pl.BlockSpec((tile_rows, tile_hw), lambda i, k: (i, k))],
            out_specs=pl.BlockSpec((tile_rows, 1), lambda i, k: (i, 0)),
            scratch_shapes=[
                pltpu.VMEM((tile_rows, 1), jnp.float32),  # running sum
                pltpu.VMEM((tile_rows, 1), jnp.float32),  # running sum of squares
            ],
        ),
        compiler_params=pltpu.CompilerParams(
            dimension_semantics=("parallel", "arbitrary"),
            vmem_limit_bytes=_VMEM_LIMIT_BYTES,
        ),
    )(x2)

    return out[:rows].reshape(b, c, 1, 1)


if __name__ == "__main__":
    key = jax.random.PRNGKey(0)

    # primary check: the module's canonical small shape
    b, c, h, w = 2, 4, 16, 16
    x = jax.random.normal(key, (b, c, h, w), dtype=jnp.float32)
    y = std_pool(x)
    jax.block_until_ready(y)
    ref = jnp.std(x.reshape(b, c, -1), axis=2, ddof=1).reshape(b, c, 1, 1)
    assert y.shape == (b, c, 1, 1)
    assert jnp.allclose(y, ref, atol=1e-5, rtol=1e-5)

    # secondary check: row count not a multiple of the tile (ragged row tile path)
    b2, c2, h2, w2 = 3, 4, 16, 16
    x2 = jax.random.normal(jax.random.PRNGKey(1), (b2, c2, h2, w2), dtype=jnp.float32)
    y2 = std_pool(x2)
    jax.block_until_ready(y2)
    ref2 = jnp.std(x2.reshape(b2, c2, -1), axis=2, ddof=1).reshape(b2, c2, 1, 1)
    assert y2.shape == (b2, c2, 1, 1)
    assert jnp.allclose(y2, ref2, atol=1e-5, rtol=1e-5)

    print("KERNEL_OK")
</pallas_src>

<mosaic_0001>
module attributes {stable_mosaic.version = 11 : i64} {
  func.func @kernel(%arg0: i32, %arg1: i32, %arg2: memref<8x256xf32, #tpu.memory_space<vmem>>, %arg3: memref<8x1xf32, #tpu.memory_space<vmem>>, %arg4: memref<8x1xf32, #tpu.memory_space<vmem>>, %arg5: memref<8x1xf32, #tpu.memory_space<vmem>>) attributes {dimension_semantics = [#tpu.dimension_semantics<parallel>, #tpu.dimension_semantics<arbitrary>], iteration_bounds = array<i64: 1, 1>, scalar_prefetch = 0 : i64, scratch_operands = 2 : i64, tpu.core_type = #tpu.core_type<tc>, window_params = [{transform_indices = @transform_0, window_bounds = array<i64: 8, 256>}, {transform_indices = @transform_1, window_bounds = array<i64: 8, 1>}]} {
    %c0_i32 = arith.constant 0 : i32
    %0 = arith.cmpi eq, %arg1, %c0_i32 : i32
    %1 = arith.extui %0 : i1 to i32
    %c0_i32_0 = arith.constant 0 : i32
    %2 = arith.cmpi ne, %1, %c0_i32_0 : i32
    scf.if %2 {
      %cst_13 = arith.constant 0.000000e+00 : f32
      %18 = vector.broadcast %cst_13 : f32 to vector<8x1xf32>
      %c0_14 = arith.constant 0 : index
      %c0_15 = arith.constant 0 : index
      %19 = vector.load %arg4[%c0_14, %c0_15] : memref<8x1xf32, #tpu.memory_space<vmem>>, vector<8x1xf32>
      tpu.vector_store %arg4[%c0_14, %c0_15], %18 {strides = array<i32>} : memref<8x1xf32, #tpu.memory_space<vmem>>, vector<8x1xf32>,
      %cst_16 = arith.constant 0.000000e+00 : f32
      %20 = vector.broadcast %cst_16 : f32 to vector<8x1xf32>
      %c0_17 = arith.constant 0 : index
      %c0_18 = arith.constant 0 : index
      %21 = vector.load %arg5[%c0_17, %c0_18] : memref<8x1xf32, #tpu.memory_space<vmem>>, vector<8x1xf32>
      tpu.vector_store %arg5[%c0_17, %c0_18], %20 {strides = array<i32>} : memref<8x1xf32, #tpu.memory_space<vmem>>, vector<8x1xf32>,
    } else {
    }
    %c0 = arith.constant 0 : index
    %c0_1 = arith.constant 0 : index
    %3 = vector.load %arg2[%c0, %c0_1] : memref<8x256xf32, #tpu.memory_space<vmem>>, vector<8x256xf32>
    %c0_2 = arith.constant 0 : index
    %c0_3 = arith.constant 0 : index
    %4 = vector.load %arg4[%c0_2, %c0_3] : memref<8x1xf32, #tpu.memory_space<vmem>>, vector<8x1xf32>
    %cst = arith.constant dense<0.000000e+00> : vector<8xf32>
    %5 = vector.multi_reduction <add>, %3, %cst [1] : vector<8x256xf32> to vector<8xf32>
    %6 = vector.shape_cast %5 : vector<8xf32> to vector<8x1xf32>
    %7 = arith.addf %4, %6 : vector<8x1xf32>
    %c0_4 = arith.constant 0 : index
    %c0_5 = arith.constant 0 : index
    %8 = vector.load %arg4[%c0_4, %c0_5] : memref<8x1xf32, #tpu.memory_space<vmem>>, vector<8x1xf32>
    tpu.vector_store %arg4[%c0_4, %c0_5], %7 {strides = array<i32>} : memref<8x1xf32, #tpu.memory_space<vmem>>, vector<8x1xf32>,
    %c0_6 = arith.constant 0 : index
    %c0_7 = arith.constant 0 : index
    %9 = vector.load %arg5[%c0_6, %c0_7] : memref<8x1xf32, #tpu.memory_space<vmem>>, vector<8x1xf32>
    %10 = arith.mulf %3, %3 : vector<8x256xf32>
    %cst_8 = arith.constant dense<0.000000e+00> : vector<8xf32>
    %11 = vector.multi_reduction <add>, %10, %cst_8 [1] : vector<8x256xf32> to vector<8xf32>
    %12 = vector.shape_cast %11 : vector<8xf32> to vector<8x1xf32>
    %13 = arith.addf %9, %12 : vector<8x1xf32>
    %c0_9 = arith.constant 0 : index
    %c0_10 = arith.constant 0 : index
    %14 = vector.load %arg5[%c0_9, %c0_10] : memref<8x1xf32, #tpu.memory_space<vmem>>, vector<8x1xf32>
    tpu.vector_store %arg5[%c0_9, %c0_10], %13 {strides = array<i32>} : memref<8x1xf32, #tpu.memory_space<vmem>>, vector<8x1xf32>,
    %c0_i32_11 = arith.constant 0 : i32
    %15 = arith.cmpi eq, %arg1, %c0_i32_11 : i32
    %16 = arith.extui %15 : i1 to i32
    %c0_i32_12 = arith.constant 0 : i32
    %17 = arith.cmpi ne, %16, %c0_i32_12 : i32
    scf.if %17 {
      %c0_13 = arith.constant 0 : index
      %c0_14 = arith.constant 0 : index
      %18 = vector.load %arg4[%c0_13, %c0_14] : memref<8x1xf32, #tpu.memory_space<vmem>>, vector<8x1xf32>
      %c0_15 = arith.constant 0 : index
      %c0_16 = arith.constant 0 : index
      %19 = vector.load %arg5[%c0_15, %c0_16] : memref<8x1xf32, #tpu.memory_space<vmem>>, vector<8x1xf32>
      %20 = arith.mulf %18, %18 : vector<8x1xf32>
      %cst_17 = arith.constant 3.906250e-03 : f32
      %21 = vector.broadcast %cst_17 : f32 to vector<8x1xf32>
      %22 = arith.mulf %20, %21 : vector<8x1xf32>
      %23 = arith.subf %19, %22 : vector<8x1xf32>
      %cst_18 = arith.constant 2.550000e+02 : f32
      %24 = vector.broadcast %cst_18 : f32 to vector<8x1xf32>
      %25 = arith.divf %23, %24 : vector<8x1xf32>
      %cst_19 = arith.constant 0.000000e+00 : f32
      %26 = vector.broadcast %cst_19 : f32 to vector<8x1xf32>
      %27 = arith.maximumf %25, %26 : vector<8x1xf32>
      %28 = math.sqrt %27 : vector<8x1xf32>
      %c0_20 = arith.constant 0 : index
      %c0_21 = arith.constant 0 : index
      %29 = vector.load %arg3[%c0_20, %c0_21] : memref<8x1xf32, #tpu.memory_space<vmem>>, vector<8x1xf32>
      tpu.vector_store %arg3[%c0_20, %c0_21], %28 {strides = array<i32>} : memref<8x1xf32, #tpu.memory_space<vmem>>, vector<8x1xf32>,
    } else {
    }
    return
  }
  func.func @transform_0(%arg0: i32, %arg1: i32) -> (i32, i32) {
    %c0_i32 = arith.constant 0 : i32
    return %arg0, %arg1 : i32, i32
  }
  func.func @transform_1(%arg0: i32, %arg1: i32) -> (i32, i32) {
    %c0_i32 = arith.constant 0 : i32
    %c0_i32_0 = arith.constant 0 : i32
    return %arg0, %c0_i32 : i32, i32
  }
}

</mosaic_0001>

<llo_original>
// kernel: tpu_custom_call.1
$region0: #{tpu_custom_call.1}
  #allocation0 [shape = 'u32[]', space=smem, size = 0x4, offset = 0x4, fixed_abs, tag = 'smem constant byte address 0x4 - core index']
  #allocation1 [shape = 'u32[144,128]{1,0:T(1,128)}', space=vmem, size = 0x12000, scoped, tag = 'internal scratch']
  #allocation2 [shape = 'f32[8,1]{1,0:T(8,128)}', space=vmem, size = 0x1000, scoped, tag = 'scratch operand']
  #allocation3 [shape = 'f32[8,1]{1,0:T(8,128)}', space=vmem, size = 0x1000, scoped, tag = 'scratch operand']
  %s0 = inlined_call_operand.hbm [shape: f32[8,256], index: 0, kind: input, shape index: {}]
  %s1 = inlined_call_operand.vmem [shape: f32[8,1], index: 1, kind: output, shape index: {}]
  %s2 = sld [smem:[#allocation0]]
  $region26: #{tpu_custom_call.1} parent=0
    _
  %s4 = ssub.s32 1, %s2
  %s5 = scalar_select 0, %s4, %s2
  $region1: #{tpu_custom_call.1} parent=0
    #allocation4 [shape = 'u8[8192]{0}', space=vmem, size = 0x2000, scoped, tag = 'input window, operand 0, single buffered']
    #allocation5 [shape = 's32[1]{0}', space=sflag, size = 0x4, scoped, tag = 'scoped memory for tpu_custom_call.1']
    %6 = vsyncpa [#allocation5], 0
    // Predicated region
    $region2: #{tpu_custom_call.1} parent=1 // pred_check
      _
    $region3: #{tpu_custom_call.1} parent=1 // pred_check_branch
      %8 = sbr.rel (0) target = $region5
    $region4: #{tpu_custom_call.1} parent=1 // pred_region
      %s10 = ssub.s32 256, 256
      %11 = vsyncadd [#allocation5], %s10
      %s13 = sshll.u32 [#allocation4], 4
      %s14 = int_to_ptr.vmem [resolvable:$true] %s13
      %16 = dma.hbm_to_vmem [thread:$0]  %s0, 256, %s14, [#allocation5]
    $region5: #{tpu_custom_call.1} parent=1 // pred_fallthru
      _
    // Predicated region
    $region6: #{tpu_custom_call.1} parent=1 // pred_check
      _
    $region7: #{tpu_custom_call.1} parent=1 // pred_check_branch
      %18 = sbr.rel (0) target = $region9
    $region8: #{tpu_custom_call.1} parent=1 // pred_region
      %19 = dma.done [#allocation5], 256
    $region9: #{tpu_custom_call.1} parent=1 // pred_fallthru
      _
    %p20 = scmp.eq.s32.totalorder 0, 0
    // Predicated region
    $region10: #{tpu_custom_call.1} parent=1 // pred_check
      %p21 = pneg %p20
    $region11: #{tpu_custom_call.1} parent=1 // pred_check_branch
      %23 = sbr.rel (%p21) target = $region13
    $region12: #{tpu_custom_call.1} parent=1 // pred_region
      %vm24 = vcmask 7168
      %25 = vst.msk [vmem:[#allocation2] sm:$0xff] %vm24, 0.0
      %26 = vst.msk [vmem:[#allocation3] sm:$0xff] %vm24, 0.0
    $region13: #{tpu_custom_call.1} parent=1 // pred_fallthru
      _
    %v27 = vld [vmem:[#allocation4] sm:$0xff]
    %v28 = vld [vmem:[#allocation4 + $0x8] sm:$0xff]
    %v29 = vld [vmem:[#allocation2] sm:$0xff]
    %v30 = vadd.f32 %v27, %v28
    %31 = vadd.xlane.f32.xlu0 %v30
    %v32 = vpop.xlane.xlu0 %31
    %v33 = vadd.f32 %v29, %v32
    %vm34 = vcmask 7168
    %35 = vst.msk [vmem:[#allocation2] sm:$0xff] %vm34, %v33
    %v36 = vld [vmem:[#allocation3] sm:$0xff]
    %v37 = vmul.f32 %v27, %v27
    %v38 = vmul.f32 %v28, %v28
    %v39 = vadd.f32 %v37, %v38
    %40 = vadd.xlane.f32.xlu0 %v39
    %v41 = vpop.xlane.xlu0 %40
    %v42 = vadd.f32 %v36, %v41
    %43 = vst.msk [vmem:[#allocation3] sm:$0xff] %vm34, %v42
    // Predicated region
    $region14: #{tpu_custom_call.1} parent=1 // pred_check
      %p44 = pneg %p20
    $region15: #{tpu_custom_call.1} parent=1 // pred_check_branch
      %46 = sbr.rel (%p44) target = $region17
    $region16: #{tpu_custom_call.1} parent=1 // pred_region
      %v47 = vld [vmem:[#allocation2] sm:$0xff]
      %v48 = vld [vmem:[#allocation3] sm:$0xff]
      %v49 = vmul.f32 %v47, %v47
      %v50 = vmul.f32 %v49, 0.00390625
      %v51 = vsub.f32 %v48, %v50
      %v52 = vrcp.pop 255.0
      %v53 = vmul.f32 %v51, %v52
      %v54 = vmax.f32 %v53, 0.0
      %v55 = vrsqrt.pop %v54
      %v56 = vmul.f32 %v54, %v55
      %vm57 = vcmp.eq.f32.partialorder %v54, inf
      %v58 = vsel %vm57, %v54, %v56
      %vm59 = vcmp.eq.f32.partialorder %v54, 0.0
      %v60 = vand.u32 %v54, 2147483648
      %v61 = vsel %vm59, %v60, %v58
      %62 = vst.msk [vmem:[%s1] sm:$0xff] %vm34, %v61
    $region17: #{tpu_custom_call.1} parent=1 // pred_fallthru
      _
    // Predicated region
    $region18: #{tpu_custom_call.1} parent=1 // pred_check
      _
    $region19: #{tpu_custom_call.1} parent=1 // pred_check_branch
      %64 = sbr.rel (0) target = $region21
    $region20: #{tpu_custom_call.1} parent=1 // pred_region
      _
    $region21: #{tpu_custom_call.1} parent=1 // pred_fallthru
      _
    // Predicated region
    $region22: #{tpu_custom_call.1} parent=1 // pred_check
      _
    $region23: #{tpu_custom_call.1} parent=1 // pred_check_branch
      %66 = sbr.rel (0) target = $region25
    $region24: #{tpu_custom_call.1} parent=1 // pred_region
      _
    $region25: #{tpu_custom_call.1} parent=1 // pred_fallthru
      _
    %67 = vsyncpa [#allocation5], 1

</llo_original>
